<compile_context>
chip_gen: v7x
topology: tpu7x:2x2x1
jax: 0.10.0
libtpu: 0.0.40
codegen_flags: <defaults>
</compile_context>

<pallas_src>
import functools

import jax
import jax.numpy as jnp
from jax.experimental import pallas as pl
from jax.experimental.pallas import tpu as pltpu

_LANE = 128
_ACC_ROWS = 8      # (8, 128) f32 accumulator tile (one vreg)
_SUB_ROWS = 512    # rows per inner compute step (~64 vregs of f32 per operand)


def _ssq_kernel(p_ref, y_ref, acc_ref, *, block_rows, blocks_per_core,
                rows_valid, needs_mask):
    """Accumulate sum((p - y)^2) of this core's row-blocks onto a resident
    (1, 8, 128) f32 accumulator (the output block itself)."""
    c = pl.program_id(0)   # core-split axis (parallel / CORE_PARALLEL)
    i = pl.program_id(1)   # row-block within this core's range (arbitrary / reduction)

    @pl.when(i == 0)
    def _():
        acc_ref[...] = jnp.zeros_like(acc_ref)

    # Logical (un-clamped) first row of this block.  For the clamped duplicate block the
    # second core may see when total_blocks does not split evenly, this is >= rows_valid
    # and the masked path zeroes the whole contribution.
    blk_row0 = (c * blocks_per_core + i) * block_rows

    sub_rows = min(_SUB_ROWS, block_rows)
    n_sub = -(-block_rows // sub_rows)

    def accumulate(masked):
        # Walk the (block_rows, 128) VMEM block in (sub_rows, 128) value-sized chunks so
        # the per-chunk working set stays small, while the HBM DMA stays one large block
        # per grid step.
        r0 = 0
        for _j in range(n_sub):
            sr = min(sub_rows, block_rows - r0)          # static; multiple of 8
            p = p_ref[pl.ds(r0, sr), :].astype(jnp.float32)
            y = y_ref[pl.ds(r0, sr), :].astype(jnp.float32)
            d = p - y
            if masked:
                row = jax.lax.broadcasted_iota(jnp.int32, d.shape, 0)
                d = jnp.where(blk_row0 + r0 + row < rows_valid, d, jnp.float32(0.0))
            d2 = d * d
            # Fold (sr, 128) onto (8, 128): the reduced axis is neither lane nor sublane,
            # so this is pure VPU adds (no cross-lane work in the hot loop).
            acc_ref[...] += d2.reshape(-1, _ACC_ROWS, _LANE).sum(axis=0)[None]
            r0 += sr

    if needs_mask:
        # Only the ragged last block and the clamped duplicate block pay for the mask.
        fully_valid = blk_row0 + block_rows <= rows_valid

        @pl.when(fully_valid)
        def _():
            accumulate(masked=False)

        @pl.when(jnp.logical_not(fully_valid))
        def _():
            accumulate(masked=True)
    else:
        accumulate(masked=False)


def _tpu_defaults():
    """(target bytes per input block, is_v7x) based on the local TPU generation."""
    try:
        kind = jax.devices()[0].device_kind.lower()
    except Exception:
        kind = ""
    big_vmem = any(t in kind for t in ("v6", "v7", "tpu7"))
    is_v7 = ("v7" in kind) or ("tpu7" in kind)
    # v6e/v7x: 4 MiB per input block (2 inputs x 2 buffers = 16 MiB, inside the 32 MiB
    # scoped default).  v5e & older: 2 MiB (8 MiB total, inside the 16 MiB scoped default).
    return ((4 << 20) if big_vmem else (2 << 20)), is_v7


def variance_scaled_loss(pred, Y, scale=5.0, block_rows=None):
    """sqrt(mean((pred - Y)**2)) / scale, computed with a Pallas TPU kernel."""
    assert pred.shape == Y.shape, "pred and Y must have identical shapes"
    n_elem = int(pred.size)
    assert n_elem > 0

    p_flat = pred.reshape(-1)   # free for contiguous arrays (no copy)
    y_flat = Y.reshape(-1)

    itemsize_min = min(pred.dtype.itemsize, Y.dtype.itemsize)
    itemsize_max = max(pred.dtype.itemsize, Y.dtype.itemsize)
    sub_mult = max(8, 32 // itemsize_min)   # sublane packing: f32->8, bf16->16, int8/fp8->32

    rows = n_elem // _LANE
    rows_k = (rows // sub_mult) * sub_mult  # rows handled by the kernel

    if (n_elem % _LANE != 0) or (rows_k == 0):
        # Not viewable as a (rows, 128) slab without materializing a padded/sliced full
        # copy of both tensors in HBM (two extra full passes).  XLA's fused reduction
        # already reads each input exactly once here, so use it for this rare case.
        # TODO(synk): flat 1-D-block Pallas variant with in-kernel lane masking to cover
        # non-128-aligned sizes with zero extra HBM traffic.
        d = p_flat.astype(jnp.float32) - y_flat.astype(jnp.float32)
        return jnp.sqrt(jnp.sum(d * d) / jnp.float32(n_elem)) / jnp.float32(scale)

    # Zero-copy (rows, 128) lane-dense views.
    p2 = p_flat.reshape(rows, _LANE)
    y2 = y_flat.reshape(rows, _LANE)

    target_block_bytes, is_v7 = _tpu_defaults()
    if block_rows is None:
        block_rows = target_block_bytes // (_LANE * itemsize_max)
    block_rows = int(min(block_rows, rows_k))
    if block_rows < rows_k:
        # dtype-aware sublane rounding when the block is not the full (kernel) extent
        block_rows = max(sub_mult, (block_rows // sub_mult) * sub_mult)

    total_blocks = -(-rows_k // block_rows)
    num_splits = 2 if total_blocks >= 2 else 1      # leading core-split axis (v7x: 2 TCs)
    blocks_per_core = -(-total_blocks // num_splits)
    needs_mask = (rows_k % block_rows != 0) or (blocks_per_core * num_splits != total_blocks)

    def in_index_map(c, i):
        # Clamp so the duplicate trailing block the last core may see stays in range;
        # its contribution is masked to zero inside the kernel.
        blk = jnp.minimum(c * blocks_per_core + i, total_blocks - 1)
        return (blk, 0)

    kernel = functools.partial(
        _ssq_kernel,
        block_rows=block_rows,
        blocks_per_core=blocks_per_core,
        rows_valid=rows_k,
        needs_mask=needs_mask,
    )

    # 2 inputs x 2 pipeline buffers x block + double-buffered accumulator + headroom;
    # keep the request well under v7x's 64 MiB/TC physical VMEM.
    in_block_bytes = block_rows * _LANE * itemsize_max
    vmem_needed = 4 * in_block_bytes + 4 * _ACC_ROWS * _LANE * 4 + (2 << 20)
    vmem_limit = int(min(max(vmem_needed, 32 << 20), 64 << 20))

    # Make the two-TensorCore split explicit on v7x; elsewhere the leading axis is just a
    # harmless sequential outer loop.
    axis0 = pltpu.CORE_PARALLEL if (is_v7 and num_splits == 2) else pltpu.PARALLEL

    partials = pl.pallas_call(
        kernel,
        out_shape=jax.ShapeDtypeStruct((num_splits, _ACC_ROWS, _LANE), jnp.float32),
        grid=(num_splits, blocks_per_core),
        in_specs=[
            pl.BlockSpec((block_rows, _LANE), in_index_map),
            pl.BlockSpec((block_rows, _LANE), in_index_map),
        ],
        out_specs=pl.BlockSpec((1, _ACC_ROWS, _LANE), lambda c, i: (c, 0, 0)),
        compiler_params=pltpu.CompilerParams(
            dimension_semantics=(axis0, pltpu.ARBITRARY),
            vmem_limit_bytes=vmem_limit,
        ),
        cost_estimate=pl.CostEstimate(
            flops=3 * rows_k * _LANE,
            transcendentals=0,
            bytes_accessed=rows_k * _LANE * (pred.dtype.itemsize + Y.dtype.itemsize)
            + num_splits * _ACC_ROWS * _LANE * 4,
        ),
    )(p2, y2)

    ssq = jnp.sum(partials)

    # < sub_mult rows (< 4 KiB) that did not fit the sublane tiling: folded in with a
    # tiny plain-JAX slice instead of padding/copying the inputs.
    lead = rows_k * _LANE
    if lead < n_elem:
        dt = p_flat[lead:].astype(jnp.float32) - y_flat[lead:].astype(jnp.float32)
        ssq = ssq + jnp.sum(dt * dt)

    mse = ssq / jnp.float32(n_elem)
    return jnp.sqrt(mse) / jnp.float32(scale)


if __name__ == "__main__":
    key = jax.random.PRNGKey(0)
    kp, ky, kp2, ky2 = jax.random.split(key, 4)

    # Main check: small shape consistent with the module (arbitrary tensors).
    pred = jax.random.normal(kp, (2, 4, 16, 16), dtype=jnp.float32)
    Y = jax.random.normal(ky, (2, 4, 16, 16), dtype=jnp.float32)

    loss_fn = jax.jit(functools.partial(variance_scaled_loss, scale=5.0))
    loss = jax.block_until_ready(loss_fn(pred, Y))

    ref = jnp.sqrt(jnp.mean((pred - Y) ** 2)) / 5.0
    assert jnp.allclose(loss, ref, rtol=1e-5, atol=1e-6), (loss, ref)

    # Secondary check: exercises the multi-block grid, the core-split axis, the ragged
    # last block, and the clamped duplicate-block masking.
    pred2 = jax.random.normal(kp2, (24, 3, 128), dtype=jnp.float32)
    Y2 = jax.random.normal(ky2, (24, 3, 128), dtype=jnp.float32)
    loss2_fn = jax.jit(functools.partial(variance_scaled_loss, scale=5.0, block_rows=16))
    loss2 = jax.block_until_ready(loss2_fn(pred2, Y2))
    ref2 = jnp.sqrt(jnp.mean((pred2 - Y2) ** 2)) / 5.0
    assert jnp.allclose(loss2, ref2, rtol=1e-5, atol=1e-6), (loss2, ref2)

    print("KERNEL_OK")
</pallas_src>

<mosaic_0001>
module attributes {stable_mosaic.version = 11 : i64} {
  func.func @_ssq_kernel(%arg0: i32, %arg1: i32, %arg2: memref<16x128xf32, #tpu.memory_space<vmem>>, %arg3: memref<16x128xf32, #tpu.memory_space<vmem>>, %arg4: memref<1x8x128xf32, #tpu.memory_space<vmem>>) attributes {dimension_semantics = [#tpu.dimension_semantics<parallel>, #tpu.dimension_semantics<arbitrary>], iteration_bounds = array<i64: 1, 1>, scalar_prefetch = 0 : i64, scratch_operands = 0 : i64, tpu.core_type = #tpu.core_type<tc>, window_params = [{transform_indices = @transform_0, window_bounds = array<i64: 16, 128>}, {transform_indices = @transform_1, window_bounds = array<i64: 16, 128>}, {transform_indices = @transform_2, window_bounds = array<i64: 1, 8, 128>}]} {
    %c0_i32 = arith.constant 0 : i32
    %0 = arith.cmpi eq, %arg1, %c0_i32 : i32
    %1 = arith.extui %0 : i1 to i32
    %c0_i32_0 = arith.constant 0 : i32
    %2 = arith.cmpi ne, %1, %c0_i32_0 : i32
    scf.if %2 {
      %cst_10 = arith.constant 0.000000e+00 : f32
      %13 = vector.broadcast %cst_10 : f32 to vector<1x8x128xf32>
      %c0_11 = arith.constant 0 : index
      %c0_12 = arith.constant 0 : index
      %c0_13 = arith.constant 0 : index
      %14 = vector.load %arg4[%c0_11, %c0_12, %c0_13] : memref<1x8x128xf32, #tpu.memory_space<vmem>>, vector<1x8x128xf32>
      tpu.vector_store %arg4[%c0_11, %c0_12, %c0_13], %13 {strides = array<i32>} : memref<1x8x128xf32, #tpu.memory_space<vmem>>, vector<1x8x128xf32>,
    } else {
    }
    %c0 = arith.constant 0 : index
    %c0_1 = arith.constant 0 : index
    %3 = vector.load %arg2[%c0, %c0_1] : memref<16x128xf32, #tpu.memory_space<vmem>>, vector<16x128xf32>
    %c0_2 = arith.constant 0 : index
    %c0_3 = arith.constant 0 : index
    %4 = vector.load %arg3[%c0_2, %c0_3] : memref<16x128xf32, #tpu.memory_space<vmem>>, vector<16x128xf32>
    %5 = arith.subf %3, %4 : vector<16x128xf32>
    %6 = arith.mulf %5, %5 : vector<16x128xf32>
    %c0_4 = arith.constant 0 : index
    %c0_5 = arith.constant 0 : index
    %c0_6 = arith.constant 0 : index
    %7 = vector.load %arg4[%c0_4, %c0_5, %c0_6] : memref<1x8x128xf32, #tpu.memory_space<vmem>>, vector<1x8x128xf32>
    %8 = vector.shape_cast %6 : vector<16x128xf32> to vector<2x8x128xf32>
    %cst = arith.constant dense<0.000000e+00> : vector<8x128xf32>
    %9 = vector.multi_reduction <add>, %8, %cst [0] : vector<2x8x128xf32> to vector<8x128xf32>
    %10 = vector.shape_cast %9 : vector<8x128xf32> to vector<1x8x128xf32>
    %11 = arith.addf %7, %10 : vector<1x8x128xf32>
    %c0_7 = arith.constant 0 : index
    %c0_8 = arith.constant 0 : index
    %c0_9 = arith.constant 0 : index
    %12 = vector.load %arg4[%c0_7, %c0_8, %c0_9] : memref<1x8x128xf32, #tpu.memory_space<vmem>>, vector<1x8x128xf32>
    tpu.vector_store %arg4[%c0_7, %c0_8, %c0_9], %11 {strides = array<i32>} : memref<1x8x128xf32, #tpu.memory_space<vmem>>, vector<1x8x128xf32>,
    return
  }
  func.func @transform_0(%arg0: i32, %arg1: i32) -> (i32, i32) {
    %c1_i32 = arith.constant 1 : i32
    %0 = arith.muli %arg0, %c1_i32 : i32
    %1 = arith.addi %0, %arg1 : i32
    %c0_i32 = arith.constant 0 : i32
    %2 = arith.minsi %1, %c0_i32 : i32
    %c0_i32_0 = arith.constant 0 : i32
    %c0_i32_1 = arith.constant 0 : i32
    return %2, %c0_i32_0 : i32, i32
  }
  func.func @transform_1(%arg0: i32, %arg1: i32) -> (i32, i32) {
    %c1_i32 = arith.constant 1 : i32
    %0 = arith.muli %arg0, %c1_i32 : i32
    %1 = arith.addi %0, %arg1 : i32
    %c0_i32 = arith.constant 0 : i32
    %2 = arith.minsi %1, %c0_i32 : i32
    %c0_i32_0 = arith.constant 0 : i32
    %c0_i32_1 = arith.constant 0 : i32
    return %2, %c0_i32_0 : i32, i32
  }
  func.func @transform_2(%arg0: i32, %arg1: i32) -> (i32, i32, i32) {
    %c0_i32 = arith.constant 0 : i32
    %c0_i32_0 = arith.constant 0 : i32
    %c0_i32_1 = arith.constant 0 : i32
    return %arg0, %c0_i32, %c0_i32_0 : i32, i32, i32
  }
}

</mosaic_0001>

<llo_original>
// kernel: variance_scaled_loss.1
$region0: #{variance_scaled_loss.1}
  #allocation0 [shape = 'u32[]', space=smem, size = 0x4, offset = 0x4, fixed_abs, tag = 'smem constant byte address 0x4 - core index']
  #allocation1 [shape = 'u32[144,128]{1,0:T(1,128)}', space=vmem, size = 0x12000, scoped, tag = 'internal scratch']
  %s0 = inlined_call_operand.vmem [shape: f32[16,128], index: 0, kind: input, shape index: {}]
  %s1 = inlined_call_operand.vmem [shape: f32[16,128], index: 1, kind: input, shape index: {}]
  %s2 = inlined_call_operand.vmem [shape: f32[1,8,128], index: 2, kind: output, shape index: {}]
  %s3 = sld [smem:[#allocation0]]
  $region22: #{variance_scaled_loss.1} parent=0
    _
  %s5 = ssub.s32 1, %s3
  %s6 = scalar_select 0, %s5, %s3
  // Predicated region
  $region2: #{variance_scaled_loss.1} parent=0 // pred_check
    _
  $region3: #{variance_scaled_loss.1} parent=0 // pred_check_branch
    %8 = sbr.rel (0) target = $region5
  $region4: #{variance_scaled_loss.1} parent=0 // pred_region
    %s9 = sadd.s32 0, 0
    %p10 = scmp.lt.s32.totalorder %s9, 0
    %s11 = scalar_select %p10, %s9, 0
    %s12 = smul.u32 2, %s11
    %p13 = scmp.lt.s32.totalorder %s12, 1
    %s14 = scalar_select %p13, %s12, 1
    %s15 = smul.addr %s14, 8
    %s16 = scalar_lea.vmem %s0, %s15
    %s17 = sadd.s32 0, 0
    %p18 = scmp.lt.s32.totalorder %s17, 0
    %s19 = scalar_select %p18, %s17, 0
    %s20 = smul.u32 2, %s19
  $region5: #{variance_scaled_loss.1} parent=0 // pred_fallthru
    _
  // Predicated region
  $region6: #{variance_scaled_loss.1} parent=0 // pred_check
    _
  $region7: #{variance_scaled_loss.1} parent=0 // pred_check_branch
    %22 = sbr.rel (0) target = $region9
  $region8: #{variance_scaled_loss.1} parent=0 // pred_region
    %s23 = sadd.s32 0, 0
    %p24 = scmp.lt.s32.totalorder %s23, 0
    %s25 = scalar_select %p24, %s23, 0
    %s26 = smul.u32 2, %s25
    %p27 = scmp.lt.s32.totalorder %s26, 1
    %s28 = scalar_select %p27, %s26, 1
    %s29 = smul.addr %s28, 8
    %s30 = scalar_lea.vmem %s1, %s29
    %s31 = sadd.s32 0, 0
    %p32 = scmp.lt.s32.totalorder %s31, 0
    %s33 = scalar_select %p32, %s31, 0
    %s34 = smul.u32 2, %s33
  $region9: #{variance_scaled_loss.1} parent=0 // pred_fallthru
    _
  %s35 = sadd.s32 0, 0
  %p36 = scmp.lt.s32.totalorder %s35, 0
  %s37 = scalar_select %p36, %s35, 0
  %s38 = smul.u32 2, %s37
  %p39 = scmp.lt.s32.totalorder %s38, 1
  %s40 = scalar_select %p39, %s38, 1
  %s41 = smul.addr %s40, 8
  %s42 = scalar_lea.vmem %s0, %s41
  %s43 = sadd.s32 0, 0
  %p44 = scmp.lt.s32.totalorder %s43, 0
  %s45 = scalar_select %p44, %s43, 0
  %s46 = smul.u32 2, %s45
  %p47 = scmp.lt.s32.totalorder %s46, 1
  %s48 = scalar_select %p47, %s46, 1
  %s49 = smul.addr %s48, 8
  %s50 = scalar_lea.vmem %s1, %s49
  %s51 = sadd.s32 0, 0
  %p52 = scmp.lt.s32.totalorder %s51, 0
  %s53 = scalar_select %p52, %s51, 0
  %s54 = smul.u32 2, %s53
  %p55 = scmp.lt.s32.totalorder %s54, 1
  %s56 = scalar_select %p55, %s54, 1
  %s57 = smul.addr %s56, 8
  %s58 = scalar_lea.vmem %s0, %s57
  %s59 = sadd.s32 0, 0
  %p60 = scmp.lt.s32.totalorder %s59, 0
  %s61 = scalar_select %p60, %s59, 0
  %s62 = smul.u32 2, %s61
  %s63 = sadd.s32 0, 0
  %p64 = scmp.lt.s32.totalorder %s63, 0
  %s65 = scalar_select %p64, %s63, 0
  %s66 = smul.u32 2, %s65
  %p67 = scmp.lt.s32.totalorder %s66, 1
  %s68 = scalar_select %p67, %s66, 1
  %s69 = smul.addr %s68, 8
  %s70 = scalar_lea.vmem %s1, %s69
  %s71 = sadd.s32 0, 0
  %p72 = scmp.lt.s32.totalorder %s71, 0
  %s73 = scalar_select %p72, %s71, 0
  %s74 = smul.u32 2, %s73
  %p75 = scmp.eq.s32.totalorder 0, 0
  // Predicated region
  $region10: #{variance_scaled_loss.1} parent=0 // pred_check
    %p76 = pneg %p75
  $region11: #{variance_scaled_loss.1} parent=0 // pred_check_branch
    %78 = sbr.rel (%p76) target = $region13
  $region12: #{variance_scaled_loss.1} parent=0 // pred_region
    %79 = vst [vmem:[%s2] sm:$0xff] 0.0
  $region13: #{variance_scaled_loss.1} parent=0 // pred_fallthru
    _
  %v80 = vld [vmem:[%s58] sm:$0xff]
  %v81 = vld [vmem:[%s58 + $0x8] sm:$0xff]
  %v82 = vld [vmem:[%s70] sm:$0xff]
  %v83 = vld [vmem:[%s70 + $0x8] sm:$0xff]
  %v84 = vsub.f32 %v80, %v82
  %v85 = vsub.f32 %v81, %v83
  %v86 = vmul.f32 %v84, %v84
  %v87 = vmul.f32 %v85, %v85
  %v88 = vld [vmem:[%s2] sm:$0xff]
  %v89 = vadd.f32 %v86, %v87
  %v90 = vadd.f32 %v88, %v89
  %91 = vst [vmem:[%s2] sm:$0xff] %v90
  // Predicated region
  $region14: #{variance_scaled_loss.1} parent=0 // pred_check
    _
  $region15: #{variance_scaled_loss.1} parent=0 // pred_check_branch
    %93 = sbr.rel (0) target = $region17
  $region16: #{variance_scaled_loss.1} parent=0 // pred_region
    _
  $region17: #{variance_scaled_loss.1} parent=0 // pred_fallthru
    _
  // Predicated region
  $region18: #{variance_scaled_loss.1} parent=0 // pred_check
    _
  $region19: #{variance_scaled_loss.1} parent=0 // pred_check_branch
    %95 = sbr.rel (0) target = $region21
  $region20: #{variance_scaled_loss.1} parent=0 // pred_region
    _
  $region21: #{variance_scaled_loss.1} parent=0 // pred_fallthru
    _

</llo_original>
